<compile_context>
chip_gen: v7x
topology: tpu7x:2x2x1
jax: 0.10.0
libtpu: 0.0.40
codegen_flags: <defaults>
</compile_context>

<pallas_src>
import jax
import jax.numpy as jnp
from jax.experimental import pallas as pl
from jax.experimental.pallas import tpu as pltpu


def _round_up(x, m):
    return ((x + m - 1) // m) * m


def _sentence_maxpool_kernel(x_ref, w_ref, b_ref, o_ref):
    """One grid step over TB batch rows.

    x_ref: (TB, S, D)  activation block
    w_ref: (D, O)      full pre-transposed weight (VMEM-resident across steps)
    b_ref: (1, O)      bias
    o_ref: (TB, O)     dense output block
    """
    TB, S, D = x_ref.shape
    O = o_ref.shape[-1]

    # Single MXU matmul with M = TB*S rows (fills the systolic array).
    x2 = x_ref[...].reshape(TB * S, D)
    h = jnp.dot(x2, w_ref[...], preferred_element_type=jnp.float32)   # (TB*S, O)

    # Seq-max first (XLU sublane reduce), then bias + ReLU on only (TB, O).
    m = jnp.max(h.reshape(TB, S, O), axis=1)                          # (TB, O)
    o_ref[...] = jnp.maximum(m + b_ref[...], 0.0).astype(o_ref.dtype)


def sentence_maxpool(x, w, b, *, use_bf16_matmul=False):
    """x: (B, S, D), w: (D, O) [fc.weight pre-transposed], b: (O,) -> (B, O)."""
    B, S, D = x.shape
    O = w.shape[1]
    out_dtype = x.dtype

    # --- pad tiny dims to the 128-lane granule (exact, sliced off at end) ---
    Dp = _round_up(D, 128) if D % 128 else D
    Op = _round_up(O, 128) if O % 128 else O

    # --- batch tile: multiple of 8 sublanes, aim for TB*S >= 128 MXU rows ---
    itemsize = 2 if use_bf16_matmul else x.dtype.itemsize
    tb_target = _round_up(max(8, pl.cdiv(128, S)), 8)
    # Cap the double-buffered activation block at ~8 MiB per buffer.
    vmem_budget = 8 * 1024 * 1024
    tb_cap = max(8, (vmem_budget // max(1, S * Dp * itemsize)) // 8 * 8)
    TB = min(tb_target, tb_cap, _round_up(B, 8))
    Bp = _round_up(B, TB)

    xp = x
    if (Bp, Dp) != (B, D):
        xp = jnp.pad(x, ((0, Bp - B), (0, 0), (0, Dp - D)))
    wp = w
    if (Dp, Op) != (D, O):
        wp = jnp.pad(w, ((0, Dp - D), (0, Op - O)))
    bp = b.reshape(1, O)
    if Op != O:
        bp = jnp.pad(bp, ((0, 0), (0, Op - O)))

    if use_bf16_matmul:  # v6e/v7x fast path: bf16 operands, f32 accumulate
        xp = xp.astype(jnp.bfloat16)
        wp = wp.astype(jnp.bfloat16)

    grid = (Bp // TB,)
    out = pl.pallas_call(
        _sentence_maxpool_kernel,
        out_shape=jax.ShapeDtypeStruct((Bp, Op), out_dtype),
        grid_spec=pltpu.PrefetchScalarGridSpec(
            num_scalar_prefetch=0,
            grid=grid,
            in_specs=[
                pl.BlockSpec((TB, S, Dp), lambda bi: (bi, 0, 0)),  # TB batch rows
                pl.BlockSpec((Dp, Op), lambda bi: (0, 0)),         # resident weight
                pl.BlockSpec((1, Op), lambda bi: (0, 0)),          # resident bias
            ],
            out_specs=pl.BlockSpec((TB, Op), lambda bi: (bi, 0)),  # dense (8+,128+)
        ),
        compiler_params=pltpu.CompilerParams(
            dimension_semantics=("parallel",)),
        cost_estimate=pl.CostEstimate(
            flops=2 * Bp * S * Dp * Op,
            transcendentals=0,
            bytes_accessed=itemsize * (Bp * S * Dp + Dp * Op)
            + 4 * Op + out_dtype.itemsize * Bp * Op),
    )(xp, wp, bp)

    return out[:B, :O]


def reference(x, w, b):
    h = jnp.maximum(jnp.einsum("bsd,do->bso", x, w) + b, 0.0)
    return jnp.max(h, axis=1)


if __name__ == "__main__":
    key = jax.random.PRNGKey(0)
    B, S, D, O = 2, 8, 32, 64            # batch, seq, word_dimension, output_dim

    kx, kw, kb = jax.random.split(key, 3)
    x = jax.random.normal(kx, (B, S, D), dtype=jnp.float32)
    # nn.Linear(word_dimension, output_dim): weight (O, D) stored pre-transposed
    # as (D, O); bias (O,)
    w = jax.random.normal(kw, (D, O), dtype=jnp.float32) * (1.0 / jnp.sqrt(D))
    b = jax.random.normal(kb, (O,), dtype=jnp.float32) * 0.01

    ref = reference(x, w, b)

    # f32 path (exact vs reference)
    out = sentence_maxpool(x, w, b)
    out = jax.block_until_ready(out)
    assert out.shape == (B, O)
    assert jnp.allclose(out, ref, atol=1e-5, rtol=1e-5)

    # bf16-operand path (v6e/v7x MXU rate); accumulation stays f32
    out_bf16 = sentence_maxpool(x, w, b, use_bf16_matmul=True)
    out_bf16 = jax.block_until_ready(out_bf16)
    assert out_bf16.shape == (B, O)
    assert jnp.allclose(out_bf16, ref, atol=1e-1, rtol=1e-1)

    print("KERNEL_OK")
</pallas_src>

<mosaic_0001>
module attributes {stable_mosaic.version = 11 : i64} {
  func.func @_sentence_maxpool_kernel(%arg0: i32, %arg1: memref<8x8x128xf32, #tpu.memory_space<vmem>>, %arg2: memref<128x128xf32, #tpu.memory_space<vmem>>, %arg3: memref<1x128xf32, #tpu.memory_space<vmem>>, %arg4: memref<8x128xf32, #tpu.memory_space<vmem>>) attributes {dimension_semantics = [#tpu.dimension_semantics<parallel>], iteration_bounds = array<i64: 1>, scalar_prefetch = 0 : i64, scratch_operands = 0 : i64, tpu.core_type = #tpu.core_type<tc>, window_params = [{transform_indices = @transform_0, window_bounds = array<i64: 8, 8, 128>}, {pipeline_mode = #tpu.pipeline_mode<synchronous>, transform_indices = @transform_1, window_bounds = array<i64: 128, 128>}, {pipeline_mode = #tpu.pipeline_mode<synchronous>, transform_indices = @transform_2, window_bounds = array<i64: 1, 128>}, {transform_indices = @transform_3, window_bounds = array<i64: 8, 128>}]} {
    %c0 = arith.constant 0 : index
    %c0_0 = arith.constant 0 : index
    %c0_1 = arith.constant 0 : index
    %0 = vector.load %arg1[%c0, %c0_0, %c0_1] : memref<8x8x128xf32, #tpu.memory_space<vmem>>, vector<8x8x128xf32>
    %1 = vector.shape_cast %0 : vector<8x8x128xf32> to vector<64x128xf32>
    %c0_2 = arith.constant 0 : index
    %c0_3 = arith.constant 0 : index
    %2 = vector.load %arg2[%c0_2, %c0_3] : memref<128x128xf32, #tpu.memory_space<vmem>>, vector<128x128xf32>
    %cst = arith.constant dense<0.000000e+00> : vector<64x128xf32>
    %3 = tpu.matmul %1, %2, %cst {dimension_numbers = #tpu.dot_dimension_numbers<[1], [0], [0], [1], [0, 0, 1, 1], [], []>} : vector<64x128xf32>, vector<128x128xf32>, vector<64x128xf32> -> vector<64x128xf32>
    %4 = vector.shape_cast %3 : vector<64x128xf32> to vector<8x8x128xf32>
    %cst_4 = arith.constant dense<0xFF800000> : vector<8x128xf32>
    %5 = vector.multi_reduction <maximumf>, %4, %cst_4 [1] : vector<8x8x128xf32> to vector<8x128xf32>
    %c0_5 = arith.constant 0 : index
    %c0_6 = arith.constant 0 : index
    %6 = vector.load %arg3[%c0_5, %c0_6] : memref<1x128xf32, #tpu.memory_space<vmem>>, vector<1x128xf32>
    %7 = vector.broadcast %6 : vector<1x128xf32> to vector<8x128xf32>
    %8 = arith.addf %5, %7 : vector<8x128xf32>
    %cst_7 = arith.constant 0.000000e+00 : f32
    %9 = vector.broadcast %cst_7 : f32 to vector<8x128xf32>
    %10 = arith.maximumf %8, %9 : vector<8x128xf32>
    %c0_8 = arith.constant 0 : index
    %c0_9 = arith.constant 0 : index
    %11 = vector.load %arg4[%c0_8, %c0_9] : memref<8x128xf32, #tpu.memory_space<vmem>>, vector<8x128xf32>
    tpu.vector_store %arg4[%c0_8, %c0_9], %10 {strides = array<i32>} : memref<8x128xf32, #tpu.memory_space<vmem>>, vector<8x128xf32>,
    return
  }
  func.func @transform_0(%arg0: i32) -> (i32, i32, i32) {
    %c0_i32 = arith.constant 0 : i32
    %c0_i32_0 = arith.constant 0 : i32
    %c0_i32_1 = arith.constant 0 : i32
    return %arg0, %c0_i32, %c0_i32_0 : i32, i32, i32
  }
  func.func @transform_1(%arg0: i32) -> (i32, i32) {
    %c0_i32 = arith.constant 0 : i32
    %c0_i32_0 = arith.constant 0 : i32
    %c0_i32_1 = arith.constant 0 : i32
    return %c0_i32, %c0_i32_0 : i32, i32
  }
  func.func @transform_2(%arg0: i32) -> (i32, i32) {
    %c0_i32 = arith.constant 0 : i32
    %c0_i32_0 = arith.constant 0 : i32
    %c0_i32_1 = arith.constant 0 : i32
    return %c0_i32, %c0_i32_0 : i32, i32
  }
  func.func @transform_3(%arg0: i32) -> (i32, i32) {
    %c0_i32 = arith.constant 0 : i32
    %c0_i32_0 = arith.constant 0 : i32
    return %arg0, %c0_i32 : i32, i32
  }
}

</mosaic_0001>

<llo_original>
// kernel: tpu_custom_call.1
$region0: #{tpu_custom_call.1}
  #allocation0 [shape = 'u32[]', space=smem, size = 0x4, offset = 0x4, fixed_abs, tag = 'smem constant byte address 0x4 - core index']
  #allocation1 [shape = 'u32[144,128]{1,0:T(1,128)}', space=vmem, size = 0x12000, scoped, tag = 'internal scratch']
  %s0 = inlined_call_operand.hbm [shape: f32[8,8,128], index: 0, kind: input, shape index: {}]
  %s1 = inlined_call_operand.hbm [shape: f32[128,128], index: 1, kind: input, shape index: {}]
  %s2 = inlined_call_operand.vmem [shape: f32[1,128], index: 2, kind: input, shape index: {}]
  %s3 = inlined_call_operand.hbm [shape: f32[8,128], index: 3, kind: output, shape index: {}]
  %s4 = sld [smem:[#allocation0]]
  $region30: #{tpu_custom_call.1} parent=0
    _
  %s6 = ssub.s32 1, %s4
  %s7 = scalar_select 0, %s6, %s4
  $region1: #{tpu_custom_call.1} parent=0
    #allocation2 [shape = 'u8[32768]{0}', space=vmem, size = 0x8000, scoped, tag = 'input window, operand 0, single buffered']
    #allocation3 [shape = 's32[1]{0}', space=sflag, size = 0x4, scoped, tag = 'scoped memory for tpu_custom_call.1']
    #allocation4 [shape = 's32[1]{0}', space=sflag, size = 0x4, scoped, tag = 'scoped memory for tpu_custom_call.1']
    #allocation5 [shape = 'u8[65536]{0}', space=vmem, size = 0x10000, scoped, tag = 'input window, operand 1, single buffered']
    #allocation6 [shape = 's32[1]{0}', space=sflag, size = 0x4, scoped, tag = 'scoped memory for tpu_custom_call.1']
    #allocation7 [shape = 'u8[4096]{0}', space=vmem, size = 0x1000, scoped, tag = 'output window, operand 0, single buffered']
    %8 = vsyncpa [#allocation3], 0
    %9 = vsyncpa [#allocation6], 0
    %10 = vsyncpa [#allocation4], 0
    // Predicated region
    $region2: #{tpu_custom_call.1} parent=1 // pred_check
      _
    $region3: #{tpu_custom_call.1} parent=1 // pred_check_branch
      %12 = sbr.rel (0) target = $region5
    $region4: #{tpu_custom_call.1} parent=1 // pred_region
      %s14 = ssub.s32 1024, 1024
      %15 = vsyncadd [#allocation3], %s14
      %s16 = sshll.u32 [#allocation2], 4
      %s17 = int_to_ptr.vmem [resolvable:$true] %s16
      %22 = dma.hbm_to_vmem [thread:$0]  %s0, 1024, %s17, [#allocation3], 128, 128, 8
    $region5: #{tpu_custom_call.1} parent=1 // pred_fallthru
      _
    // Predicated region
    $region6: #{tpu_custom_call.1} parent=1 // pred_check
      _
    $region7: #{tpu_custom_call.1} parent=1 // pred_check_branch
      %24 = sbr.rel (0) target = $region9
    $region8: #{tpu_custom_call.1} parent=1 // pred_region
      %s26 = ssub.s32 2048, 2048
      %27 = vsyncadd [#allocation6], %s26
      %s28 = sshll.u32 [#allocation5], 4
      %s29 = int_to_ptr.vmem [resolvable:$true] %s28
      %34 = dma.hbm_to_vmem [thread:$0]  %s1, 2048, %s29, [#allocation6], 128, 128, 8
    $region9: #{tpu_custom_call.1} parent=1 // pred_fallthru
      _
    // Predicated region
    $region10: #{tpu_custom_call.1} parent=1 // pred_check
      _
    $region11: #{tpu_custom_call.1} parent=1 // pred_check_branch
      %36 = sbr.rel (0) target = $region13
    $region12: #{tpu_custom_call.1} parent=1 // pred_region
      _
    $region13: #{tpu_custom_call.1} parent=1 // pred_fallthru
      _
    // Predicated region
    $region14: #{tpu_custom_call.1} parent=1 // pred_check
      _
    $region15: #{tpu_custom_call.1} parent=1 // pred_check_branch
      %38 = sbr.rel (0) target = $region17
    $region16: #{tpu_custom_call.1} parent=1 // pred_region
      %39 = dma.done [#allocation3], 1024
    $region17: #{tpu_custom_call.1} parent=1 // pred_fallthru
      _
    // Predicated region
    $region18: #{tpu_custom_call.1} parent=1 // pred_check
      _
    $region19: #{tpu_custom_call.1} parent=1 // pred_check_branch
      %41 = sbr.rel (0) target = $region21
    $region20: #{tpu_custom_call.1} parent=1 // pred_region
      %42 = dma.done [#allocation6], 2048
    $region21: #{tpu_custom_call.1} parent=1 // pred_fallthru
      _
    %v43 = vld [vmem:[#allocation2] sm:$0xff]
    %v44 = vld [vmem:[#allocation2 + $0x8] sm:$0xff]
    %v45 = vld [vmem:[#allocation2 + $0x10] sm:$0xff]
    %v46 = vld [vmem:[#allocation2 + $0x18] sm:$0xff]
    %v47 = vld [vmem:[#allocation2 + $0x20] sm:$0xff]
    %v48 = vld [vmem:[#allocation2 + $0x28] sm:$0xff]
    %v49 = vld [vmem:[#allocation2 + $0x30] sm:$0xff]
    %v50 = vld [vmem:[#allocation2 + $0x38] sm:$0xff]
    %v51 = vld [vmem:[#allocation5] sm:$0xff]
    %v52 = vld [vmem:[#allocation5 + $0x8] sm:$0xff]
    %v53 = vld [vmem:[#allocation5 + $0x10] sm:$0xff]
    %v54 = vld [vmem:[#allocation5 + $0x18] sm:$0xff]
    %v55 = vld [vmem:[#allocation5 + $0x20] sm:$0xff]
    %v56 = vld [vmem:[#allocation5 + $0x28] sm:$0xff]
    %v57 = vld [vmem:[#allocation5 + $0x30] sm:$0xff]
    %v58 = vld [vmem:[#allocation5 + $0x38] sm:$0xff]
    %v59 = vld [vmem:[#allocation5 + $0x40] sm:$0xff]
    %v60 = vld [vmem:[#allocation5 + $0x48] sm:$0xff]
    %v61 = vld [vmem:[#allocation5 + $0x50] sm:$0xff]
    %v62 = vld [vmem:[#allocation5 + $0x58] sm:$0xff]
    %v63 = vld [vmem:[#allocation5 + $0x60] sm:$0xff]
    %v64 = vld [vmem:[#allocation5 + $0x68] sm:$0xff]
    %v65 = vld [vmem:[#allocation5 + $0x70] sm:$0xff]
    %v66 = vld [vmem:[#allocation5 + $0x78] sm:$0xff]
    %67 = vmatprep.subr.mxu0 0.0
    %68 = vmatpush1.msra.mxu0 %v51
    %69 = vmatprep.subr.mxu0 0.0
    %70 = vmatpush1.msra.mxu0 %v52
    %71 = vmatprep.subr.mxu0 0.0
    %72 = vmatpush1.msra.mxu0 %v53
    %73 = vmatprep.subr.mxu0 0.0
    %74 = vmatpush1.msra.mxu0 %v54
    %75 = vmatprep.subr.mxu0 0.0
    %76 = vmatpush1.msra.mxu0 %v55
    %77 = vmatprep.subr.mxu0 0.0
    %78 = vmatpush1.msra.mxu0 %v56
    %79 = vmatprep.subr.mxu0 0.0
    %80 = vmatpush1.msra.mxu0 %v57
    %81 = vmatprep.subr.mxu0 0.0
    %82 = vmatpush1.msra.mxu0 %v58
    %83 = vmatprep.subr.mxu0 0.0
    %84 = vmatpush1.msra.mxu0 %v59
    %85 = vmatprep.subr.mxu0 0.0
    %86 = vmatpush1.msra.mxu0 %v60
    %87 = vmatprep.subr.mxu0 0.0
    %88 = vmatpush1.msra.mxu0 %v61
    %89 = vmatprep.subr.mxu0 0.0
    %90 = vmatpush1.msra.mxu0 %v62
    %91 = vmatprep.subr.mxu0 0.0
    %92 = vmatpush1.msra.mxu0 %v63
    %93 = vmatprep.subr.mxu0 0.0
    %94 = vmatpush1.msra.mxu0 %v64
    %95 = vmatprep.subr.mxu0 0.0
    %96 = vmatpush1.msra.mxu0 %v65
    %97 = vmatprep.subr.mxu0 0.0
    %98 = vmatpush1.msra.mxu0 %v66
    %99 = vmatprep.subr.mxu0 0.0
    %100 = vmatpush1.msra.mxu0 0.0
    %101 = vmatprep.subr.mxu0 0.0
    %102 = vmatpush1.msra.mxu0 0.0
    %103 = vmatprep.subr.mxu0 0.0
    %104 = vmatpush1.msra.mxu0 0.0
    %105 = vmatprep.subr.mxu0 0.0
    %106 = vmatpush1.msra.mxu0 0.0
    %107 = vmatprep.subr.mxu0 0.0
    %108 = vmatpush1.msra.mxu0 0.0
    %109 = vmatprep.subr.mxu0 0.0
    %110 = vmatpush1.msra.mxu0 0.0
    %111 = vmatprep.subr.mxu0 0.0
    %112 = vmatpush1.msra.mxu0 0.0
    %113 = vmatprep.subr.mxu0 0.0
    %114 = vmatpush1.msra.mxu0 0.0
    %115 = vmatprep.subr.mxu0 0.0
    %116 = vmatpush1.msra.mxu0 0.0
    %117 = vmatprep.subr.mxu0 0.0
    %118 = vmatpush1.msra.mxu0 0.0
    %119 = vmatprep.subr.mxu0 0.0
    %120 = vmatpush1.msra.mxu0 0.0
    %121 = vmatprep.subr.mxu0 0.0
    %122 = vmatpush1.msra.mxu0 0.0
    %123 = vmatprep.subr.mxu0 0.0
    %124 = vmatpush1.msra.mxu0 0.0
    %125 = vmatprep.subr.mxu0 0.0
    %126 = vmatpush1.msra.mxu0 0.0
    %127 = vmatprep.subr.mxu0 0.0
    %128 = vmatpush1.msra.mxu0 0.0
    %129 = vmatprep.subr.mxu0 0.0
    %130 = vmatpush1.msra.mxu0 0.0
    %131 = vmatprep.mubr.f32.mxu0 0.0
    %132 = vmatmul.mubr.f32.gmra.mrb[0].mxu0 %v43
    %v133 = vpop.f32.mrb[0].mxu0
    %v134 = vadd.f32 0.0, %v133
    %v135 = vpop.f32.mrb[0].mxu0
    %136 = vmatprep.mubr.f32.mxu0 0.0
    %137 = vmatmul.mubr.f32.gmra.mrb[0].mxu0 %v44
    %v138 = vpop.f32.mrb[0].mxu0
    %v139 = vadd.f32 0.0, %v138
    %v140 = vpop.f32.mrb[0].mxu0
    %141 = vmatprep.mubr.f32.mxu0 0.0
    %142 = vmatmul.mubr.f32.gmra.mrb[0].mxu0 %v45
    %v143 = vpop.f32.mrb[0].mxu0
    %v144 = vadd.f32 0.0, %v143
    %v145 = vpop.f32.mrb[0].mxu0
    %146 = vmatprep.mubr.f32.mxu0 0.0
    %147 = vmatmul.mubr.f32.gmra.mrb[0].mxu0 %v46
    %v148 = vpop.f32.mrb[0].mxu0
    %v149 = vadd.f32 0.0, %v148
    %v150 = vpop.f32.mrb[0].mxu0
    %151 = vmatprep.mubr.f32.mxu0 0.0
    %152 = vmatmul.mubr.f32.gmra.mrb[0].mxu0 %v47
    %v153 = vpop.f32.mrb[0].mxu0
    %v154 = vadd.f32 0.0, %v153
    %v155 = vpop.f32.mrb[0].mxu0
    %156 = vmatprep.mubr.f32.mxu0 0.0
    %157 = vmatmul.mubr.f32.gmra.mrb[0].mxu0 %v48
    %v158 = vpop.f32.mrb[0].mxu0
    %v159 = vadd.f32 0.0, %v158
    %v160 = vpop.f32.mrb[0].mxu0
    %161 = vmatprep.mubr.f32.mxu0 0.0
    %162 = vmatmul.mubr.f32.gmra.mrb[0].mxu0 %v49
    %v163 = vpop.f32.mrb[0].mxu0
    %v164 = vadd.f32 0.0, %v163
    %v165 = vpop.f32.mrb[0].mxu0
    %166 = vmatprep.mubr.f32.mxu0 0.0
    %167 = vmatmul.mubr.f32.gmra.mrb[0].mxu0 %v50
    %v168 = vpop.f32.mrb[0].mxu0
    %v169 = vadd.f32 0.0, %v168
    %v170 = vpop.f32.mrb[0].mxu0
    %171 = vdwg.mxu0
    %v172 = vrot.slane %v134, 4
    %v173 = vmax.f32 %v134, %v172
    %v174 = vrot.slane %v173, 2
    %v175 = vmax.f32 %v173, %v174
    %v176 = vrot.slane %v175, 1
    %v177 = vmax.f32 %v175, %v176
    %v178 = vrot.slane %v139, 4
    %v179 = vmax.f32 %v139, %v178
    %v180 = vrot.slane %v179, 2
    %v181 = vmax.f32 %v179, %v180
    %v182 = vrot.slane %v181, 1
    %v183 = vmax.f32 %v181, %v182
    %v184 = vrot.slane %v144, 4
    %v185 = vmax.f32 %v144, %v184
    %v186 = vrot.slane %v185, 2
    %v187 = vmax.f32 %v185, %v186
    %v188 = vrot.slane %v187, 1
    %v189 = vmax.f32 %v187, %v188
    %v190 = vrot.slane %v149, 4
    %v191 = vmax.f32 %v149, %v190
    %v192 = vrot.slane %v191, 2
    %v193 = vmax.f32 %v191, %v192
    %v194 = vrot.slane %v193, 1
    %v195 = vmax.f32 %v193, %v194
    %v196 = vrot.slane %v154, 4
    %v197 = vmax.f32 %v154, %v196
    %v198 = vrot.slane %v197, 2
    %v199 = vmax.f32 %v197, %v198
    %v200 = vrot.slane %v199, 1
    %v201 = vmax.f32 %v199, %v200
    %v202 = vrot.slane %v159, 4
    %v203 = vmax.f32 %v159, %v202
    %v204 = vrot.slane %v203, 2
    %v205 = vmax.f32 %v203, %v204
    %v206 = vrot.slane %v205, 1
    %v207 = vmax.f32 %v205, %v206
    %v208 = vrot.slane %v164, 4
    %v209 = vmax.f32 %v164, %v208
    %v210 = vrot.slane %v209, 2
    %v211 = vmax.f32 %v209, %v210
    %v212 = vrot.slane %v211, 1
    %v213 = vmax.f32 %v211, %v212
    %v214 = vrot.slane %v169, 4
    %v215 = vmax.f32 %v169, %v214
    %v216 = vrot.slane %v215, 2
    %v217 = vmax.f32 %v215, %v216
    %v218 = vrot.slane %v217, 1
    %v219 = vmax.f32 %v217, %v218
    %v220 = vld [vmem:[%s2] sm:$0x1]
    %v222 = vlaneseq
    %v223 = vshrl.u32 %v222, 7
    %v224 = vsub.s32 0, %v223
    %v225 = vrot.slane %v220, %v224
    %v227 = vadd.f32 %v177, %v225
    %v228 = vadd.f32 %v183, %v225
    %v229 = vadd.f32 %v189, %v225
    %v230 = vadd.f32 %v195, %v225
    %v231 = vadd.f32 %v201, %v225
    %v232 = vadd.f32 %v207, %v225
    %v233 = vadd.f32 %v213, %v225
    %v234 = vadd.f32 %v219, %v225
    %v235 = vmax.f32 %v227, 0.0
    %v236 = vmax.f32 %v228, 0.0
    %v237 = vmax.f32 %v229, 0.0
    %v238 = vmax.f32 %v230, 0.0
    %v239 = vmax.f32 %v231, 0.0
    %v240 = vmax.f32 %v232, 0.0
    %v241 = vmax.f32 %v233, 0.0
    %v242 = vmax.f32 %v234, 0.0
    %v251 = vrot.slane %v236, 7
    %vm252 = vcmask 1041409
    %v253 = vsel %vm252, %v251, %v235
    %v254 = vrot.slane %v237, 6
    %vm255 = vcmask 1042434
    %v256 = vsel %vm255, %v254, %v253
    %v257 = vrot.slane %v238, 5
    %vm258 = vcmask 1043459
    %v259 = vsel %vm258, %v257, %v256
    %v260 = vrot.slane %v239, 4
    %vm261 = vcmask 1044484
    %v262 = vsel %vm261, %v260, %v259
    %v263 = vrot.slane %v240, 3
    %vm264 = vcmask 1045509
    %v265 = vsel %vm264, %v263, %v262
    %v266 = vrot.slane %v241, 2
    %vm267 = vcmask 1046534
    %v268 = vsel %vm267, %v266, %v265
    %v269 = vrot.slane %v242, 1
    %vm270 = vcmask 1047559
    %v271 = vsel %vm270, %v269, %v268
    %273 = vst [vmem:[#allocation7] sm:$0xff] %v271
    // Predicated region
    $region22: #{tpu_custom_call.1} parent=1 // pred_check
      _
    $region23: #{tpu_custom_call.1} parent=1 // pred_check_branch
      %275 = sbr.rel (0) target = $region25
    $region24: #{tpu_custom_call.1} parent=1 // pred_region
      %s277 = ssub.s32 128, 128
      %278 = vsyncadd [#allocation4], %s277
      %s280 = sshll.u32 [#allocation7], 4
      %s281 = int_to_ptr.vmem [resolvable:$true] %s280
      %283 = dma.vmem_to_hbm [thread:$0]  %s281, 128, %s3, [#allocation4]
    $region25: #{tpu_custom_call.1} parent=1 // pred_fallthru
      _
    // Predicated region
    $region26: #{tpu_custom_call.1} parent=1 // pred_check
      _
    $region27: #{tpu_custom_call.1} parent=1 // pred_check_branch
      %285 = sbr.rel (0) target = $region29
    $region28: #{tpu_custom_call.1} parent=1 // pred_region
      %286 = dma.done [#allocation4], 128
    $region29: #{tpu_custom_call.1} parent=1 // pred_fallthru
      _
    %287 = vsyncpa [#allocation3], 1
    %288 = vsyncpa [#allocation6], 1
    %289 = vsyncpa [#allocation4], 1

</llo_original>
